<compile_context>
chip_gen: v7x
topology: tpu7x:2x2x1
jax: 0.10.0
libtpu: 0.0.40
codegen_flags: <defaults>
</compile_context>

<pallas_src>
import jax
import jax.numpy as jnp
from jax import lax
from jax.experimental import pallas as pl
from jax.experimental.pallas import tpu as pltpu

NEG_FILL = -1e30
CE_LANE_CAP = 512          # review: keep CE live working set spill-free
UNC_LANE_CAP = 1024
VMEM_LIMIT_BYTES = 32 * 1024 * 1024   # >= every chip's default scoped limit, < v7x physical
VMEM_BLOCK_BUDGET = 20 << 20          # per-grid-step double-buffered blocks + scratch
VREG_BUDGET = 48 * 4096               # ~48 of 64 vregs for live tile values


# --------------------------------------------------------------------------- #
# helpers
# --------------------------------------------------------------------------- #
def _pad_to(x, target_shape, value=0):
    widths = [(0, t - s) for s, t in zip(x.shape, target_shape)]
    if all(w == (0, 0) for w in widths):
        return x
    return jnp.pad(x, widths, constant_values=value)


def _choose_nb(N):
    """Sublane tile for the sample axis: amortize per-step overhead, but keep >= 4
    steps on the 'parallel' axis where possible so v7x can shard across its 2 TCs."""
    for nb in (32, 16):
        if -(-N // nb) >= 4:
            return nb
    return 8


def _p_tiling(P, C, nb, live_vals, lane_cap):
    """Lane tile Pt (multiple of 128) bounded by (a) explicit cap, (b) vreg working
    set (live_vals live (nb, Pt) f32 values must not spill), (c) per-step VMEM budget
    including the C-channel double-buffered block. Returns (Pt, P padded to mult of Pt)."""
    cap = min(lane_cap,
              VREG_BUDGET // (live_vals * nb * 4),
              VMEM_BLOCK_BUDGET // ((2 * C + 8) * nb * 4))
    pt = max(128, (cap // 128) * 128)
    p128 = -(-P // 128) * 128
    pt = min(pt, p128)
    p_pad = -(-P // pt) * pt
    return pt, p_pad


# --------------------------------------------------------------------------- #
# Pallas kernel 1: uncertainty_fn
#   logits : [C, Npad, Ppad] f32  (block (C, NB, Pt))
#   ignore : [Npad, Ppad]    f32  (block (NB, Pt))
#   output : [Npad, Ppad]    f32  uncertainty = top2[1] - top2[0], -1000 where ignore
# Single-pass running top-2: ties give m2 == m1, same as torch.topk values.
# --------------------------------------------------------------------------- #
def _uncertainty_kernel(lg_ref, ign_ref, o_ref):
    C = lg_ref.shape[0]
    m1 = lg_ref[0]
    m2 = jnp.full_like(m1, NEG_FILL)
    for c in range(1, C):
        x = lg_ref[c]
        m2 = jnp.maximum(m2, jnp.minimum(x, m1))
        m1 = jnp.maximum(m1, x)
    u = m2 - m1
    o_ref[...] = jnp.where(ign_ref[...] != 0.0, -1000.0, u)


def uncertainty_pallas(point_logits_cnp, point_ignore_np, nb):
    """point_logits_cnp [C, N, P] f32, point_ignore_np [N, P] f32 -> uncertainty [N, P]."""
    C, N, P = point_logits_cnp.shape
    assert C >= 2, "uncertainty_fn needs at least 2 class logits (topk k=2)"
    Npad = -(-N // nb) * nb
    Pt, Ppad = _p_tiling(P, C, nb, live_vals=5, lane_cap=UNC_LANE_CAP)
    lg = _pad_to(point_logits_cnp, (C, Npad, Ppad), value=0.0)
    ig = _pad_to(point_ignore_np, (Npad, Ppad), value=1.0)   # padded points -> ignored
    grid = (Npad // nb, Ppad // Pt)
    out = pl.pallas_call(
        _uncertainty_kernel,
        out_shape=jax.ShapeDtypeStruct((Npad, Ppad), jnp.float32),
        grid=grid,
        in_specs=[
            pl.BlockSpec((C, nb, Pt), lambda i, j: (0, i, j)),
            pl.BlockSpec((nb, Pt), lambda i, j: (i, j)),
        ],
        out_specs=pl.BlockSpec((nb, Pt), lambda i, j: (i, j)),
        compiler_params=pltpu.CompilerParams(
            dimension_semantics=("parallel", "parallel"),
            vmem_limit_bytes=VMEM_LIMIT_BYTES),
    )(lg, ig)
    return out[:N, :P]


# --------------------------------------------------------------------------- #
# Pallas kernel 2: fused per-point cross-entropy (ignore_index=-100) + L2 norm.
# Elementwise accumulation into (NB, Pt) VMEM scratch across P tiles; one XLU
# reduction per sample block; single lane-dense (NB, 128) output written at the
# last P step (lane 0 = sum_ce, lane 1 = sum_valid, lane 2 = sum_norm).
# --------------------------------------------------------------------------- #
def _point_ce_kernel(lg_ref, lb_ref, out_ref, ce_acc, valid_acc, norm_acc):
    C = lg_ref.shape[0]
    j = pl.program_id(1)

    @pl.when(j == 0)
    def _init():
        ce_acc[...] = jnp.zeros_like(ce_acc)
        valid_acc[...] = jnp.zeros_like(valid_acc)
        norm_acc[...] = jnp.zeros_like(norm_acc)

    lb = lb_ref[...]                          # (NB, Pt) int32
    valid = lb != -100
    lb_c = jnp.where(valid, lb, 0)

    # pass 1: channel max (numerical stability of the log-sum-exp)
    m = lg_ref[0]
    for c in range(1, C):
        m = jnp.maximum(m, lg_ref[c])

    # pass 2: sum-exp, picked logit, sum of squares (dense VPU/EUP, no XLU)
    se = jnp.zeros_like(m)
    picked = jnp.zeros_like(m)
    sq = jnp.zeros_like(m)
    for c in range(C):
        x = lg_ref[c]
        se = se + jnp.exp(x - m)
        picked = picked + jnp.where(lb_c == c, x, 0.0)
        sq = sq + x * x

    lse = m + jnp.log(se)
    ce_acc[...] += jnp.where(valid, lse - picked, 0.0)
    valid_acc[...] += valid.astype(jnp.float32)
    norm_acc[...] += jnp.sqrt(sq)

    # collapse lanes once per sample block; lane-dense unmasked store
    @pl.when(j == pl.num_programs(1) - 1)
    def _finish():
        ce_s = jnp.sum(ce_acc[...], axis=1, keepdims=True)      # (NB, 1)
        va_s = jnp.sum(valid_acc[...], axis=1, keepdims=True)
        no_s = jnp.sum(norm_acc[...], axis=1, keepdims=True)
        lane = lax.broadcasted_iota(jnp.int32, out_ref.shape, 1)
        out = jnp.where(lane == 0, ce_s, 0.0)
        out = jnp.where(lane == 1, va_s, out)
        out = jnp.where(lane == 2, no_s, out)
        out_ref[...] = out


def point_losses_pallas(point_logits_cnp, point_labels_np, nb):
    """point_logits_cnp [C, N, P] f32, point_labels_np [N, P] int
       -> (sum_ce, sum_valid, sum_norm), each [N] f32 (per-sample sums over P)."""
    C, N, P = point_logits_cnp.shape
    Npad = -(-N // nb) * nb
    Pt, Ppad = _p_tiling(P, C, nb, live_vals=8, lane_cap=CE_LANE_CAP)
    lg = _pad_to(point_logits_cnp, (C, Npad, Ppad), value=0.0)
    lb = _pad_to(point_labels_np.astype(jnp.int32), (Npad, Ppad), value=-100)
    grid = (Npad // nb, Ppad // Pt)

    out = pl.pallas_call(
        _point_ce_kernel,
        out_shape=jax.ShapeDtypeStruct((Npad, 128), jnp.float32),
        grid=grid,
        in_specs=[
            pl.BlockSpec((C, nb, Pt), lambda i, j: (0, i, j)),
            pl.BlockSpec((nb, Pt), lambda i, j: (i, j)),
        ],
        out_specs=pl.BlockSpec((nb, 128), lambda i, j: (i, 0)),
        scratch_shapes=[pltpu.VMEM((nb, Pt), jnp.float32) for _ in range(3)],
        compiler_params=pltpu.CompilerParams(
            dimension_semantics=("parallel", "arbitrary"),
            vmem_limit_bytes=VMEM_LIMIT_BYTES),
    )(lg, lb)
    out = out[:N]
    return out[:, 0], out[:, 1], out[:, 2]


# --------------------------------------------------------------------------- #
# JAX glue: batched grid_sample at point coords (detectron2 point_sample semantics,
# align_corners=False, padding_mode='zeros'), channel-major [C, N, P] output.
# TODO(synk): replace with a Pallas gather (scalar-prefetched corner indices, pred
# kept in HBM via memory_space=pl.ANY) to avoid the (C, N, P) HBM round-trips.
# --------------------------------------------------------------------------- #
def _point_sample_cnp(img, coords, mode='bilinear', img_idx=None):
    """img [Ni, C, H, W]; coords [N, P, 2] (x, y) in [0, 1]; img_idx [N] optional map
    from sample -> image (defaults to identity, requires Ni == N). Returns [C, N, P]."""
    Ni, C, H, W = img.shape
    N, P, _ = coords.shape
    x = coords[..., 0] * W - 0.5
    y = coords[..., 1] * H - 0.5

    if img_idx is None:
        def gather_core(iy, ix):
            return jax.vmap(lambda im, yy, xx: im[:, yy, xx], out_axes=1)(img, iy, ix)
    else:
        def gather_core(iy, ix):
            return jax.vmap(lambda b, yy, xx: img[b][:, yy, xx], out_axes=1)(img_idx, iy, ix)

    def gather(ixf, iyf):
        valid = (ixf >= 0) & (ixf <= W - 1) & (iyf >= 0) & (iyf <= H - 1)
        ixc = jnp.clip(ixf, 0, W - 1).astype(jnp.int32)
        iyc = jnp.clip(iyf, 0, H - 1).astype(jnp.int32)
        v = gather_core(iyc, ixc)                       # (C, N, P)
        return jnp.where(valid[None], v, 0.0)

    if mode == 'nearest':
        return gather(jnp.round(x), jnp.round(y))
    # bilinear
    x0 = jnp.floor(x); y0 = jnp.floor(y)
    x1 = x0 + 1.0;     y1 = y0 + 1.0
    wx1 = x - x0; wx0 = 1.0 - wx1
    wy1 = y - y0; wy0 = 1.0 - wy1
    v00 = gather(x0, y0); v10 = gather(x1, y0)
    v01 = gather(x0, y1); v11 = gather(x1, y1)
    return (v00 * (wx0 * wy0)[None] + v10 * (wx1 * wy0)[None]
            + v01 * (wx0 * wy1)[None] + v11 * (wx1 * wy1)[None])


def get_uncertain_point_coords_with_randomness(pred_logits, ign_ds, img_idx, key,
                                               num_points, oversample_ratio,
                                               importance_sample_ratio, nb):
    """pred_logits [N, C, h, w]; ign_ds [BT, 1, h, w]; returns coords [N, num_points, 2]."""
    N = pred_logits.shape[0]
    num_sampled = int(num_points * oversample_ratio)
    k1, k2 = jax.random.split(key)
    point_coords = jax.random.uniform(k1, (N, num_sampled, 2), dtype=jnp.float32)
    logits_pts = _point_sample_cnp(pred_logits, point_coords, mode='bilinear')          # [C, N, Ps]
    ign_pts = _point_sample_cnp(ign_ds, point_coords, mode='bilinear',
                                img_idx=img_idx)[0]                                     # [N, Ps]
    uncert = uncertainty_pallas(logits_pts, ign_pts, nb)                                # [N, Ps]
    num_uncertain = int(importance_sample_ratio * num_points)
    num_random = num_points - num_uncertain
    _, idx = lax.top_k(uncert, num_uncertain)
    pc = jnp.take_along_axis(point_coords, idx[..., None], axis=1)                      # [N, nu, 2]
    if num_random > 0:
        pc_rand = jax.random.uniform(k2, (N, num_random, 2), dtype=jnp.float32)
        pc = jnp.concatenate([pc, pc_rand], axis=1)
    return pc


def _bilinear_downsample_4x(x):
    """F.interpolate(x, scale_factor=0.25, mode='bilinear', align_corners=False):
    source coord = 4*i + 1.5 -> exact average of the central 2x2 of each 4x4 block."""
    return 0.25 * (x[..., 1::4, 1::4] + x[..., 1::4, 2::4]
                   + x[..., 2::4, 1::4] + x[..., 2::4, 2::4])


# --------------------------------------------------------------------------- #
# SemanticSegLoss (sparse forward), all L layers batched into one pass.
# --------------------------------------------------------------------------- #
class SemanticSegLoss:
    def __init__(self, num_points, oversample_ratio, importance_sample_ratio, loss_type,
                 w_ce, w_dice, ignore_null_class_logits, logit_regularization_loss):
        self.num_points = num_points
        self.oversample_ratio = oversample_ratio
        self.importance_sample_ratio = importance_sample_ratio
        self.w_ce = w_ce
        self.w_dice = w_dice
        self.w_reg = 0.001
        assert loss_type in ('sparse', 'dense', 'dense_full_res')
        self.type = loss_type
        self.ignore_null_class_logits = ignore_null_class_logits
        self.logit_regularization_loss = logit_regularization_loss
        self._forward_jit = jax.jit(self._forward_sparse_core)

    def __call__(self, pred_mask_logits, gt_masks, ignore_masks, key):
        # TODO(synk): dense path needs bootstrapped_cross_entropy / multiclass_dice_loss
        # which are not defined in the provided reference; only the sparse path is implemented.
        assert self.type == 'sparse'
        return self._forward_jit(pred_mask_logits, gt_masks, ignore_masks, key)

    def _forward_sparse_core(self, pred_mask_logits, gt_masks, ignore_masks, key):
        L, B, C, T, h, w = pred_mask_logits.shape
        Hf, Wf = gt_masks.shape[-2:]
        BT = B * T
        N = L * BT
        nb = _choose_nb(N)
        # 'L B C T H W -> (L B T) C H W'   (layers folded into the sample axis)
        pred = jnp.transpose(pred_mask_logits, (0, 1, 3, 2, 4, 5)).reshape(N, C, h, w)
        gt = gt_masks.reshape(BT, 1, Hf, Wf).astype(jnp.float32)
        ign = ignore_masks.reshape(BT, 1, Hf, Wf).astype(jnp.float32)
        gtign = jnp.concatenate([gt, ign], axis=1)          # fused 2-channel nearest gather
        ign_ds = _bilinear_downsample_4x(ign)
        ign_ds = (ign_ds > 0.5).astype(jnp.float32)         # [BT, 1, h, w]

        img_idx = jnp.arange(N, dtype=jnp.int32) % BT       # sample -> (B T) image

        coords = get_uncertain_point_coords_with_randomness(
            pred, ign_ds, img_idx, key, self.num_points, self.oversample_ratio,
            self.importance_sample_ratio, nb)                # [N, P, 2]

        gtign_pts = _point_sample_cnp(gtign, coords, mode='nearest', img_idx=img_idx)  # [2, N, P]
        point_labels = gtign_pts[0].astype(jnp.int32)
        point_ignore = gtign_pts[1] != 0.0
        # reference asserts all non-ignored labels are in [0, C); map out-of-range ids to
        # ignore_index to avoid silently wrong CE (F.cross_entropy would error there).
        point_labels = jnp.where((point_labels < 0) | (point_labels >= C), -100, point_labels)
        point_labels = jnp.where(point_ignore, -100, point_labels)

        point_logits = _point_sample_cnp(pred, coords, mode='bilinear')                # [C, N, P]

        # TODO(synk): eliminate_null_class_logits needs data-dependent unique();
        # the module is instantiated with ignore_null_class_logits=False.

        sum_ce, sum_valid, sum_norm = point_losses_pallas(point_logits, point_labels, nb)
        sum_ce = sum_ce.reshape(L, BT)
        sum_valid = sum_valid.reshape(L, BT)
        sum_norm = sum_norm.reshape(L, BT)

        # F.cross_entropy(reduction='mean', ignore_index=-100) per layer; clamp denom
        # to avoid NaN if every sampled point of a layer is ignored.
        loss_ce = sum_ce.sum(-1) / jnp.maximum(sum_valid.sum(-1), 1.0)                 # (L,)
        # torch.linalg.norm(dim=1).mean() averages over ALL points (ignored included).
        loss_reg = sum_norm.sum(-1) / float(BT * self.num_points)                      # (L,)
        loss_dice = 0.0  # TODO(synk): multiclass_dice_loss not defined in reference; w_dice == 0

        losses = {'loss_semantic_ce': loss_ce}
        if self.logit_regularization_loss:
            losses['loss_semantic_reg'] = loss_reg
            total = self.w_ce * loss_ce + self.w_dice * loss_dice + self.w_reg * loss_reg
        else:
            total = self.w_ce * loss_ce + self.w_dice * loss_dice
        losses['loss_semantic_total'] = total
        return losses


# --------------------------------------------------------------------------- #
if __name__ == "__main__":
    key = jax.random.PRNGKey(0)
    k1, k2, k3, k4 = jax.random.split(key, 4)

    L, B, C, T, H, W = 2, 2, 8, 2, 32, 32          # pred is at 1/4 resolution of gt
    pred_mask_logits = jax.random.normal(k1, (L, B, C, T, H // 4, W // 4), dtype=jnp.float32)
    gt_masks = jax.random.randint(k2, (B, T, H, W), 0, C, dtype=jnp.int32)
    ignore_masks = jax.random.bernoulli(k3, 0.1, (B, T, H, W))

    loss_mod = SemanticSegLoss(num_points=128, oversample_ratio=3, importance_sample_ratio=0.75,
                               loss_type='sparse', w_ce=1.0, w_dice=0.0,
                               ignore_null_class_logits=False, logit_regularization_loss=True)

    out = loss_mod(pred_mask_logits, gt_masks, ignore_masks, k4)
    out = jax.block_until_ready(out)
    print("KERNEL_OK")
</pallas_src>

<mosaic_0001>
module attributes {stable_mosaic.version = 11 : i64} {
  func.func @_uncertainty_kernel(%arg0: i32, %arg1: i32, %arg2: memref<8x8x384xf32, #tpu.memory_space<vmem>>, %arg3: memref<8x384xf32, #tpu.memory_space<vmem>>, %arg4: memref<8x384xf32, #tpu.memory_space<vmem>>) attributes {dimension_semantics = [#tpu.dimension_semantics<parallel>, #tpu.dimension_semantics<parallel>], iteration_bounds = array<i64: 1, 1>, scalar_prefetch = 0 : i64, scratch_operands = 0 : i64, tpu.core_type = #tpu.core_type<tc>, window_params = [{transform_indices = @transform_0, window_bounds = array<i64: 8, 8, 384>}, {transform_indices = @transform_1, window_bounds = array<i64: 8, 384>}, {transform_indices = @transform_2, window_bounds = array<i64: 8, 384>}]} {
    %c0 = arith.constant 0 : index
    %c0_0 = arith.constant 0 : index
    %c0_1 = arith.constant 0 : index
    %0 = vector.load %arg2[%c0, %c0_0, %c0_1] : memref<8x8x384xf32, #tpu.memory_space<vmem>>, vector<1x8x384xf32>
    %1 = vector.shape_cast %0 : vector<1x8x384xf32> to vector<8x384xf32>
    %cst = arith.constant -1.000000e+30 : f32
    %2 = vector.broadcast %cst : f32 to vector<8x384xf32>
    %c1 = arith.constant 1 : index
    %c0_2 = arith.constant 0 : index
    %c0_3 = arith.constant 0 : index
    %3 = vector.load %arg2[%c1, %c0_2, %c0_3] : memref<8x8x384xf32, #tpu.memory_space<vmem>>, vector<1x8x384xf32>
    %4 = vector.shape_cast %3 : vector<1x8x384xf32> to vector<8x384xf32>
    %5 = arith.minimumf %4, %1 : vector<8x384xf32>
    %6 = arith.maximumf %2, %5 : vector<8x384xf32>
    %7 = arith.maximumf %1, %4 : vector<8x384xf32>
    %c2 = arith.constant 2 : index
    %c0_4 = arith.constant 0 : index
    %c0_5 = arith.constant 0 : index
    %8 = vector.load %arg2[%c2, %c0_4, %c0_5] : memref<8x8x384xf32, #tpu.memory_space<vmem>>, vector<1x8x384xf32>
    %9 = vector.shape_cast %8 : vector<1x8x384xf32> to vector<8x384xf32>
    %10 = arith.minimumf %9, %7 : vector<8x384xf32>
    %11 = arith.maximumf %6, %10 : vector<8x384xf32>
    %12 = arith.maximumf %7, %9 : vector<8x384xf32>
    %c3 = arith.constant 3 : index
    %c0_6 = arith.constant 0 : index
    %c0_7 = arith.constant 0 : index
    %13 = vector.load %arg2[%c3, %c0_6, %c0_7] : memref<8x8x384xf32, #tpu.memory_space<vmem>>, vector<1x8x384xf32>
    %14 = vector.shape_cast %13 : vector<1x8x384xf32> to vector<8x384xf32>
    %15 = arith.minimumf %14, %12 : vector<8x384xf32>
    %16 = arith.maximumf %11, %15 : vector<8x384xf32>
    %17 = arith.maximumf %12, %14 : vector<8x384xf32>
    %c4 = arith.constant 4 : index
    %c0_8 = arith.constant 0 : index
    %c0_9 = arith.constant 0 : index
    %18 = vector.load %arg2[%c4, %c0_8, %c0_9] : memref<8x8x384xf32, #tpu.memory_space<vmem>>, vector<1x8x384xf32>
    %19 = vector.shape_cast %18 : vector<1x8x384xf32> to vector<8x384xf32>
    %20 = arith.minimumf %19, %17 : vector<8x384xf32>
    %21 = arith.maximumf %16, %20 : vector<8x384xf32>
    %22 = arith.maximumf %17, %19 : vector<8x384xf32>
    %c5 = arith.constant 5 : index
    %c0_10 = arith.constant 0 : index
    %c0_11 = arith.constant 0 : index
    %23 = vector.load %arg2[%c5, %c0_10, %c0_11] : memref<8x8x384xf32, #tpu.memory_space<vmem>>, vector<1x8x384xf32>
    %24 = vector.shape_cast %23 : vector<1x8x384xf32> to vector<8x384xf32>
    %25 = arith.minimumf %24, %22 : vector<8x384xf32>
    %26 = arith.maximumf %21, %25 : vector<8x384xf32>
    %27 = arith.maximumf %22, %24 : vector<8x384xf32>
    %c6 = arith.constant 6 : index
    %c0_12 = arith.constant 0 : index
    %c0_13 = arith.constant 0 : index
    %28 = vector.load %arg2[%c6, %c0_12, %c0_13] : memref<8x8x384xf32, #tpu.memory_space<vmem>>, vector<1x8x384xf32>
    %29 = vector.shape_cast %28 : vector<1x8x384xf32> to vector<8x384xf32>
    %30 = arith.minimumf %29, %27 : vector<8x384xf32>
    %31 = arith.maximumf %26, %30 : vector<8x384xf32>
    %32 = arith.maximumf %27, %29 : vector<8x384xf32>
    %c7 = arith.constant 7 : index
    %c0_14 = arith.constant 0 : index
    %c0_15 = arith.constant 0 : index
    %33 = vector.load %arg2[%c7, %c0_14, %c0_15] : memref<8x8x384xf32, #tpu.memory_space<vmem>>, vector<1x8x384xf32>
    %34 = vector.shape_cast %33 : vector<1x8x384xf32> to vector<8x384xf32>
    %35 = arith.minimumf %34, %32 : vector<8x384xf32>
    %36 = arith.maximumf %31, %35 : vector<8x384xf32>
    %37 = arith.maximumf %32, %34 : vector<8x384xf32>
    %38 = arith.subf %36, %37 : vector<8x384xf32>
    %c0_16 = arith.constant 0 : index
    %c0_17 = arith.constant 0 : index
    %39 = vector.load %arg3[%c0_16, %c0_17] : memref<8x384xf32, #tpu.memory_space<vmem>>, vector<8x384xf32>
    %cst_18 = arith.constant 0.000000e+00 : f32
    %40 = vector.broadcast %cst_18 : f32 to vector<8x384xf32>
    %41 = arith.cmpf one, %39, %40 : vector<8x384xf32>
    %cst_19 = arith.constant -1.000000e+03 : f32
    %42 = vector.broadcast %cst_19 : f32 to vector<8x384xf32>
    %43 = arith.select %41, %42, %38 : vector<8x384xi1>, vector<8x384xf32>
    %c0_20 = arith.constant 0 : index
    %c0_21 = arith.constant 0 : index
    %44 = vector.load %arg4[%c0_20, %c0_21] : memref<8x384xf32, #tpu.memory_space<vmem>>, vector<8x384xf32>
    tpu.vector_store %arg4[%c0_20, %c0_21], %43 {strides = array<i32>} : memref<8x384xf32, #tpu.memory_space<vmem>>, vector<8x384xf32>,
    return
  }
  func.func @transform_0(%arg0: i32, %arg1: i32) -> (i32, i32, i32) {
    %c0_i32 = arith.constant 0 : i32
    %c0_i32_0 = arith.constant 0 : i32
    return %c0_i32, %arg0, %arg1 : i32, i32, i32
  }
  func.func @transform_1(%arg0: i32, %arg1: i32) -> (i32, i32) {
    %c0_i32 = arith.constant 0 : i32
    return %arg0, %arg1 : i32, i32
  }
  func.func @transform_2(%arg0: i32, %arg1: i32) -> (i32, i32) {
    %c0_i32 = arith.constant 0 : i32
    return %arg0, %arg1 : i32, i32
  }
}

module attributes {stable_mosaic.version = 11 : i64} {
  func.func @_point_ce_kernel(%arg0: i32, %arg1: i32, %arg2: memref<8x8x128xf32, #tpu.memory_space<vmem>>, %arg3: memref<8x128xi32, #tpu.memory_space<vmem>>, %arg4: memref<8x128xf32, #tpu.memory_space<vmem>>, %arg5: memref<8x128xf32, #tpu.memory_space<vmem>>, %arg6: memref<8x128xf32, #tpu.memory_space<vmem>>, %arg7: memref<8x128xf32, #tpu.memory_space<vmem>>) attributes {dimension_semantics = [#tpu.dimension_semantics<parallel>, #tpu.dimension_semantics<arbitrary>], iteration_bounds = array<i64: 1, 1>, scalar_prefetch = 0 : i64, scratch_operands = 3 : i64, tpu.core_type = #tpu.core_type<tc>, window_params = [{transform_indices = @transform_0, window_bounds = array<i64: 8, 8, 128>}, {transform_indices = @transform_1, window_bounds = array<i64: 8, 128>}, {transform_indices = @transform_2, window_bounds = array<i64: 8, 128>}]} {
    %c0_i32 = arith.constant 0 : i32
    %0 = arith.cmpi eq, %arg1, %c0_i32 : i32
    %1 = arith.extui %0 : i1 to i32
    %c0_i32_0 = arith.constant 0 : i32
    %2 = arith.cmpi ne, %1, %c0_i32_0 : i32
    scf.if %2 {
      %cst_70 = arith.constant 0.000000e+00 : f32
      %150 = vector.broadcast %cst_70 : f32 to vector<8x128xf32>
      %c0_71 = arith.constant 0 : index
      %c0_72 = arith.constant 0 : index
      %151 = vector.load %arg5[%c0_71, %c0_72] : memref<8x128xf32, #tpu.memory_space<vmem>>, vector<8x128xf32>
      tpu.vector_store %arg5[%c0_71, %c0_72], %150 {strides = array<i32>} : memref<8x128xf32, #tpu.memory_space<vmem>>, vector<8x128xf32>,
      %cst_73 = arith.constant 0.000000e+00 : f32
      %152 = vector.broadcast %cst_73 : f32 to vector<8x128xf32>
      %c0_74 = arith.constant 0 : index
      %c0_75 = arith.constant 0 : index
      %153 = vector.load %arg6[%c0_74, %c0_75] : memref<8x128xf32, #tpu.memory_space<vmem>>, vector<8x128xf32>
      tpu.vector_store %arg6[%c0_74, %c0_75], %152 {strides = array<i32>} : memref<8x128xf32, #tpu.memory_space<vmem>>, vector<8x128xf32>,
      %cst_76 = arith.constant 0.000000e+00 : f32
      %154 = vector.broadcast %cst_76 : f32 to vector<8x128xf32>
      %c0_77 = arith.constant 0 : index
      %c0_78 = arith.constant 0 : index
      %155 = vector.load %arg7[%c0_77, %c0_78] : memref<8x128xf32, #tpu.memory_space<vmem>>, vector<8x128xf32>
      tpu.vector_store %arg7[%c0_77, %c0_78], %154 {strides = array<i32>} : memref<8x128xf32, #tpu.memory_space<vmem>>, vector<8x128xf32>,
    } else {
    }
    %c0 = arith.constant 0 : index
    %c0_1 = arith.constant 0 : index
    %3 = vector.load %arg3[%c0, %c0_1] : memref<8x128xi32, #tpu.memory_space<vmem>>, vector<8x128xi32>
    %c-100_i32 = arith.constant -100 : i32
    %4 = vector.broadcast %c-100_i32 : i32 to vector<8x128xi32>
    %5 = arith.cmpi ne, %3, %4 : vector<8x128xi32>
    %c0_i32_2 = arith.constant 0 : i32
    %6 = vector.broadcast %c0_i32_2 : i32 to vector<8x128xi32>
    %7 = arith.select %5, %3, %6 : vector<8x128xi1>, vector<8x128xi32>
    %c0_3 = arith.constant 0 : index
    %c0_4 = arith.constant 0 : index
    %c0_5 = arith.constant 0 : index
    %8 = vector.load %arg2[%c0_3, %c0_4, %c0_5] : memref<8x8x128xf32, #tpu.memory_space<vmem>>, vector<1x8x128xf32>
    %9 = vector.shape_cast %8 : vector<1x8x128xf32> to vector<8x128xf32>
    %c1 = arith.constant 1 : index
    %c0_6 = arith.constant 0 : index
    %c0_7 = arith.constant 0 : index
    %10 = vector.load %arg2[%c1, %c0_6, %c0_7] : memref<8x8x128xf32, #tpu.memory_space<vmem>>, vector<1x8x128xf32>
    %11 = vector.shape_cast %10 : vector<1x8x128xf32> to vector<8x128xf32>
    %12 = arith.maximumf %9, %11 : vector<8x128xf32>
    %c2 = arith.constant 2 : index
    %c0_8 = arith.constant 0 : index
    %c0_9 = arith.constant 0 : index
    %13 = vector.load %arg2[%c2, %c0_8, %c0_9] : memref<8x8x128xf32, #tpu.memory_space<vmem>>, vector<1x8x128xf32>
    %14 = vector.shape_cast %13 : vector<1x8x128xf32> to vector<8x128xf32>
    %15 = arith.maximumf %12, %14 : vector<8x128xf32>
    %c3 = arith.constant 3 : index
    %c0_10 = arith.constant 0 : index
    %c0_11 = arith.constant 0 : index
    %16 = vector.load %arg2[%c3, %c0_10, %c0_11] : memref<8x8x128xf32, #tpu.memory_space<vmem>>, vector<1x8x128xf32>
    %17 = vector.shape_cast %16 : vector<1x8x128xf32> to vector<8x128xf32>
    %18 = arith.maximumf %15, %17 : vector<8x128xf32>
    %c4 = arith.constant 4 : index
    %c0_12 = arith.constant 0 : index
    %c0_13 = arith.constant 0 : index
    %19 = vector.load %arg2[%c4, %c0_12, %c0_13] : memref<8x8x128xf32, #tpu.memory_space<vmem>>, vector<1x8x128xf32>
    %20 = vector.shape_cast %19 : vector<1x8x128xf32> to vector<8x128xf32>
    %21 = arith.maximumf %18, %20 : vector<8x128xf32>
    %c5 = arith.constant 5 : index
    %c0_14 = arith.constant 0 : index
    %c0_15 = arith.constant 0 : index
    %22 = vector.load %arg2[%c5, %c0_14, %c0_15] : memref<8x8x128xf32, #tpu.memory_space<vmem>>, vector<1x8x128xf32>
    %23 = vector.shape_cast %22 : vector<1x8x128xf32> to vector<8x128xf32>
    %24 = arith.maximumf %21, %23 : vector<8x128xf32>
    %c6 = arith.constant 6 : index
    %c0_16 = arith.constant 0 : index
    %c0_17 = arith.constant 0 : index
    %25 = vector.load %arg2[%c6, %c0_16, %c0_17] : memref<8x8x128xf32, #tpu.memory_space<vmem>>, vector<1x8x128xf32>
    %26 = vector.shape_cast %25 : vector<1x8x128xf32> to vector<8x128xf32>
    %27 = arith.maximumf %24, %26 : vector<8x128xf32>
    %c7 = arith.constant 7 : index
    %c0_18 = arith.constant 0 : index
    %c0_19 = arith.constant 0 : index
    %28 = vector.load %arg2[%c7, %c0_18, %c0_19] : memref<8x8x128xf32, #tpu.memory_space<vmem>>, vector<1x8x128xf32>
    %29 = vector.shape_cast %28 : vector<1x8x128xf32> to vector<8x128xf32>
    %30 = arith.maximumf %27, %29 : vector<8x128xf32>
    %cst = arith.constant 0.000000e+00 : f32
    %31 = vector.broadcast %cst : f32 to vector<8x128xf32>
    %cst_20 = arith.constant 0.000000e+00 : f32
    %32 = vector.broadcast %cst_20 : f32 to vector<8x128xf32>
    %cst_21 = arith.constant 0.000000e+00 : f32
    %33 = vector.broadcast %cst_21 : f32 to vector<8x128xf32>
    %c0_22 = arith.constant 0 : index
    %c0_23 = arith.constant 0 : index
    %c0_24 = arith.constant 0 : index
    %34 = vector.load %arg2[%c0_22, %c0_23, %c0_24] : memref<8x8x128xf32, #tpu.memory_space<vmem>>, vector<1x8x128xf32>
    %35 = vector.shape_cast %34 : vector<1x8x128xf32> to vector<8x128xf32>
    %36 = arith.subf %35, %30 : vector<8x128xf32>
    %37 = math.exp %36 : vector<8x128xf32>
    %38 = arith.addf %31, %37 : vector<8x128xf32>
    %c0_i32_25 = arith.constant 0 : i32
    %39 = vector.broadcast %c0_i32_25 : i32 to vector<8x128xi32>
    %40 = arith.cmpi eq, %7, %39 : vector<8x128xi32>
    %cst_26 = arith.constant 0.000000e+00 : f32
    %41 = vector.broadcast %cst_26 : f32 to vector<8x128xf32>
    %42 = arith.select %40, %35, %41 : vector<8x128xi1>, vector<8x128xf32>
    %43 = arith.addf %32, %42 : vector<8x128xf32>
    %44 = arith.mulf %35, %35 : vector<8x128xf32>
    %45 = arith.addf %33, %44 : vector<8x128xf32>
    %c1_27 = arith.constant 1 : index
    %c0_28 = arith.constant 0 : index
    %c0_29 = arith.constant 0 : index
    %46 = vector.load %arg2[%c1_27, %c0_28, %c0_29] : memref<8x8x128xf32, #tpu.memory_space<vmem>>, vector<1x8x128xf32>
    %47 = vector.shape_cast %46 : vector<1x8x128xf32> to vector<8x128xf32>
    %48 = arith.subf %47, %30 : vector<8x128xf32>
    %49 = math.exp %48 : vector<8x128xf32>
    %50 = arith.addf %38, %49 : vector<8x128xf32>
    %c1_i32 = arith.constant 1 : i32
    %51 = vector.broadcast %c1_i32 : i32 to vector<8x128xi32>
    %52 = arith.cmpi eq, %7, %51 : vector<8x128xi32>
    %cst_30 = arith.constant 0.000000e+00 : f32
    %53 = vector.broadcast %cst_30 : f32 to vector<8x128xf32>
    %54 = arith.select %52, %47, %53 : vector<8x128xi1>, vector<8x128xf32>
    %55 = arith.addf %43, %54 : vector<8x128xf32>
    %56 = arith.mulf %47, %47 : vector<8x128xf32>
    %57 = arith.addf %45, %56 : vector<8x128xf32>
    %c2_31 = arith.constant 2 : index
    %c0_32 = arith.constant 0 : index
    %c0_33 = arith.constant 0 : index
    %58 = vector.load %arg2[%c2_31, %c0_32, %c0_33] : memref<8x8x128xf32, #tpu.memory_space<vmem>>, vector<1x8x128xf32>
    %59 = vector.shape_cast %58 : vector<1x8x128xf32> to vector<8x128xf32>
    %60 = arith.subf %59, %30 : vector<8x128xf32>
    %61 = math.exp %60 : vector<8x128xf32>
    %62 = arith.addf %50, %61 : vector<8x128xf32>
    %c2_i32 = arith.constant 2 : i32
    %63 = vector.broadcast %c2_i32 : i32 to vector<8x128xi32>
    %64 = arith.cmpi eq, %7, %63 : vector<8x128xi32>
    %cst_34 = arith.constant 0.000000e+00 : f32
    %65 = vector.broadcast %cst_34 : f32 to vector<8x128xf32>
    %66 = arith.select %64, %59, %65 : vector<8x128xi1>, vector<8x128xf32>
    %67 = arith.addf %55, %66 : vector<8x128xf32>
    %68 = arith.mulf %59, %59 : vector<8x128xf32>
    %69 = arith.addf %57, %68 : vector<8x128xf32>
    %c3_35 = arith.constant 3 : index
    %c0_36 = arith.constant 0 : index
    %c0_37 = arith.constant 0 : index
    %70 = vector.load %arg2[%c3_35, %c0_36, %c0_37] : memref<8x8x128xf32, #tpu.memory_space<vmem>>, vector<1x8x128xf32>
    %71 = vector.shape_cast %70 : vector<1x8x128xf32> to vector<8x128xf32>
    %72 = arith.subf %71, %30 : vector<8x128xf32>
    %73 = math.exp %72 : vector<8x128xf32>
    %74 = arith.addf %62, %73 : vector<8x128xf32>
    %c3_i32 = arith.constant 3 : i32
    %75 = vector.broadcast %c3_i32 : i32 to vector<8x128xi32>
    %76 = arith.cmpi eq, %7, %75 : vector<8x128xi32>
    %cst_38 = arith.constant 0.000000e+00 : f32
    %77 = vector.broadcast %cst_38 : f32 to vector<8x128xf32>
    %78 = arith.select %76, %71, %77 : vector<8x128xi1>, vector<8x128xf32>
    %79 = arith.addf %67, %78 : vector<8x128xf32>
    %80 = arith.mulf %71, %71 : vector<8x128xf32>
    %81 = arith.addf %69, %80 : vector<8x128xf32>
    %c4_39 = arith.constant 4 : index
    %c0_40 = arith.constant 0 : index
    %c0_41 = arith.constant 0 : index
    %82 = vector.load %arg2[%c4_39, %c0_40, %c0_41] : memref<8x8x128xf32, #tpu.memory_space<vmem>>, vector<1x8x128xf32>
    %83 = vector.shape_cast %82 : vector<1x8x128xf32> to vector<8x128xf32>
    %84 = arith.subf %83, %30 : vector<8x128xf32>
    %85 = math.exp %84 : vector<8x128xf32>
    %86 = arith.addf %74, %85 : vector<8x128xf32>
    %c4_i32 = arith.constant 4 : i32
    %87 = vector.broadcast %c4_i32 : i32 to vector<8x128xi32>
    %88 = arith.cmpi eq, %7, %87 : vector<8x128xi32>
    %cst_42 = arith.constant 0.000000e+00 : f32
    %89 = vector.broadcast %cst_42 : f32 to vector<8x128xf32>
    %90 = arith.select %88, %83, %89 : vector<8x128xi1>, vector<8x128xf32>
    %91 = arith.addf %79, %90 : vector<8x128xf32>
    %92 = arith.mulf %83, %83 : vector<8x128xf32>
    %93 = arith.addf %81, %92 : vector<8x128xf32>
    %c5_43 = arith.constant 5 : index
    %c0_44 = arith.constant 0 : index
    %c0_45 = arith.constant 0 : index
    %94 = vector.load %arg2[%c5_43, %c0_44, %c0_45] : memref<8x8x128xf32, #tpu.memory_space<vmem>>, vector<1x8x128xf32>
    %95 = vector.shape_cast %94 : vector<1x8x128xf32> to vector<8x128xf32>
    %96 = arith.subf %95, %30 : vector<8x128xf32>
    %97 = math.exp %96 : vector<8x128xf32>
    %98 = arith.addf %86, %97 : vector<8x128xf32>
    %c5_i32 = arith.constant 5 : i32
    %99 = vector.broadcast %c5_i32 : i32 to vector<8x128xi32>
    %100 = arith.cmpi eq, %7, %99 : vector<8x128xi32>
    %cst_46 = arith.constant 0.000000e+00 : f32
    %101 = vector.broadcast %cst_46 : f32 to vector<8x128xf32>
    %102 = arith.select %100, %95, %101 : vector<8x128xi1>, vector<8x128xf32>
    %103 = arith.addf %91, %102 : vector<8x128xf32>
    %104 = arith.mulf %95, %95 : vector<8x128xf32>
    %105 = arith.addf %93, %104 : vector<8x128xf32>
    %c6_47 = arith.constant 6 : index
    %c0_48 = arith.constant 0 : index
    %c0_49 = arith.constant 0 : index
    %106 = vector.load %arg2[%c6_47, %c0_48, %c0_49] : memref<8x8x128xf32, #tpu.memory_space<vmem>>, vector<1x8x128xf32>
    %107 = vector.shape_cast %106 : vector<1x8x128xf32> to vector<8x128xf32>
    %108 = arith.subf %107, %30 : vector<8x128xf32>
    %109 = math.exp %108 : vector<8x128xf32>
    %110 = arith.addf %98, %109 : vector<8x128xf32>
    %c6_i32 = arith.constant 6 : i32
    %111 = vector.broadcast %c6_i32 : i32 to vector<8x128xi32>
    %112 = arith.cmpi eq, %7, %111 : vector<8x128xi32>
    %cst_50 = arith.constant 0.000000e+00 : f32
    %113 = vector.broadcast %cst_50 : f32 to vector<8x128xf32>
    %114 = arith.select %112, %107, %113 : vector<8x128xi1>, vector<8x128xf32>
    %115 = arith.addf %103, %114 : vector<8x128xf32>
    %116 = arith.mulf %107, %107 : vector<8x128xf32>
    %117 = arith.addf %105, %116 : vector<8x128xf32>
    %c7_51 = arith.constant 7 : index
    %c0_52 = arith.constant 0 : index
    %c0_53 = arith.constant 0 : index
    %118 = vector.load %arg2[%c7_51, %c0_52, %c0_53] : memref<8x8x128xf32, #tpu.memory_space<vmem>>, vector<1x8x128xf32>
    %119 = vector.shape_cast %118 : vector<1x8x128xf32> to vector<8x128xf32>
    %120 = arith.subf %119, %30 : vector<8x128xf32>
    %121 = math.exp %120 : vector<8x128xf32>
    %122 = arith.addf %110, %121 : vector<8x128xf32>
    %c7_i32 = arith.constant 7 : i32
    %123 = vector.broadcast %c7_i32 : i32 to vector<8x128xi32>
    %124 = arith.cmpi eq, %7, %123 : vector<8x128xi32>
    %cst_54 = arith.constant 0.000000e+00 : f32
    %125 = vector.broadcast %cst_54 : f32 to vector<8x128xf32>
    %126 = arith.select %124, %119, %125 : vector<8x128xi1>, vector<8x128xf32>
    %127 = arith.addf %115, %126 : vector<8x128xf32>
    %128 = arith.mulf %119, %119 : vector<8x128xf32>
    %129 = arith.addf %117, %128 : vector<8x128xf32>
    %130 = math.log %122 : vector<8x128xf32>
    %131 = arith.addf %30, %130 : vector<8x128xf32>
    %c0_55 = arith.constant 0 : index
    %c0_56 = arith.constant 0 : index
    %132 = vector.load %arg5[%c0_55, %c0_56] : memref<8x128xf32, #tpu.memory_space<vmem>>, vector<8x128xf32>
    %133 = arith.subf %131, %127 : vector<8x128xf32>
    %cst_57 = arith.constant 0.000000e+00 : f32
    %134 = vector.broadcast %cst_57 : f32 to vector<8x128xf32>
    %135 = arith.select %5, %133, %134 : vector<8x128xi1>, vector<8x128xf32>
    %136 = arith.addf %132, %135 : vector<8x128xf32>
    %c0_58 = arith.constant 0 : index
    %c0_59 = arith.constant 0 : index
    %137 = vector.load %arg5[%c0_58, %c0_59] : memref<8x128xf32, #tpu.memory_space<vmem>>, vector<8x128xf32>
    tpu.vector_store %arg5[%c0_58, %c0_59], %136 {strides = array<i32>} : memref<8x128xf32, #tpu.memory_space<vmem>>, vector<8x128xf32>,
    %c0_60 = arith.constant 0 : index
    %c0_61 = arith.constant 0 : index
    %138 = vector.load %arg6[%c0_60, %c0_61] : memref<8x128xf32, #tpu.memory_space<vmem>>, vector<8x128xf32>
    %139 = arith.extui %5 : vector<8x128xi1> to vector<8x128xi32>
    %140 = arith.sitofp %139 : vector<8x128xi32> to vector<8x128xf32>
    %141 = arith.addf %138, %140 : vector<8x128xf32>
    %c0_62 = arith.constant 0 : index
    %c0_63 = arith.constant 0 : index
    %142 = vector.load %arg6[%c0_62, %c0_63] : memref<8x128xf32, #tpu.memory_space<vmem>>, vector<8x128xf32>
    tpu.vector_store %arg6[%c0_62, %c0_63], %141 {strides = array<i32>} : memref<8x128xf32, #tpu.memory_space<vmem>>, vector<8x128xf32>,
    %c0_64 = arith.constant 0 : index
    %c0_65 = arith.constant 0 : index
    %143 = vector.load %arg7[%c0_64, %c0_65] : memref<8x128xf32, #tpu.memory_space<vmem>>, vector<8x128xf32>
    %144 = math.sqrt %129 : vector<8x128xf32>
    %145 = arith.addf %143, %144 : vector<8x128xf32>
    %c0_66 = arith.constant 0 : index
    %c0_67 = arith.constant 0 : index
    %146 = vector.load %arg7[%c0_66, %c0_67] : memref<8x128xf32, #tpu.memory_space<vmem>>, vector<8x128xf32>
    tpu.vector_store %arg7[%c0_66, %c0_67], %145 {strides = array<i32>} : memref<8x128xf32, #tpu.memory_space<vmem>>, vector<8x128xf32>,
    %c0_i32_68 = arith.constant 0 : i32
    %147 = arith.cmpi eq, %arg1, %c0_i32_68 : i32
    %148 = arith.extui %147 : i1 to i32
    %c0_i32_69 = arith.constant 0 : i32
    %149 = arith.cmpi ne, %148, %c0_i32_69 : i32
    scf.if %149 {
      %c0_70 = arith.constant 0 : index
      %c0_71 = arith.constant 0 : index
      %150 = vector.load %arg5[%c0_70, %c0_71] : memref<8x128xf32, #tpu.memory_space<vmem>>, vector<8x128xf32>
      %cst_72 = arith.constant dense<0.000000e+00> : vector<8xf32>
      %151 = vector.multi_reduction <add>, %150, %cst_72 [1] : vector<8x128xf32> to vector<8xf32>
      %152 = vector.shape_cast %151 : vector<8xf32> to vector<8x1xf32>
      %c0_73 = arith.constant 0 : index
      %c0_74 = arith.constant 0 : index
      %153 = vector.load %arg6[%c0_73, %c0_74] : memref<8x128xf32, #tpu.memory_space<vmem>>, vector<8x128xf32>
      %cst_75 = arith.constant dense<0.000000e+00> : vector<8xf32>
      %154 = vector.multi_reduction <add>, %153, %cst_75 [1] : vector<8x128xf32> to vector<8xf32>
      %155 = vector.shape_cast %154 : vector<8xf32> to vector<8x1xf32>
      %c0_76 = arith.constant 0 : index
      %c0_77 = arith.constant 0 : index
      %156 = vector.load %arg7[%c0_76, %c0_77] : memref<8x128xf32, #tpu.memory_space<vmem>>, vector<8x128xf32>
      %cst_78 = arith.constant dense<0.000000e+00> : vector<8xf32>
      %157 = vector.multi_reduction <add>, %156, %cst_78 [1] : vector<8x128xf32> to vector<8xf32>
      %158 = vector.shape_cast %157 : vector<8xf32> to vector<8x1xf32>
      %159 = tpu.iota {dimensions = array<i32: 1>} : vector<8x128xi32>
      %c0_i32_79 = arith.constant 0 : i32
      %160 = vector.broadcast %c0_i32_79 : i32 to vector<8x128xi32>
      %161 = arith.cmpi eq, %159, %160 : vector<8x128xi32>
      %cst_80 = arith.constant 0.000000e+00 : f32
      %162 = vector.shape_cast %152 : vector<8x1xf32> to vector<8x1xf32>
      %163 = vector.broadcast %162 : vector<8x1xf32> to vector<8x128xf32>
      %164 = vector.broadcast %cst_80 : f32 to vector<8x128xf32>
      %165 = arith.select %161, %163, %164 : vector<8x128xi1>, vector<8x128xf32>
      %c1_i32_81 = arith.constant 1 : i32
      %166 = vector.broadcast %c1_i32_81 : i32 to vector<8x128xi32>
      %167 = arith.cmpi eq, %159, %166 : vector<8x128xi32>
      %168 = vector.shape_cast %155 : vector<8x1xf32> to vector<8x1xf32>
      %169 = vector.broadcast %168 : vector<8x1xf32> to vector<8x128xf32>
      %170 = arith.select %167, %169, %165 : vector<8x128xi1>, vector<8x128xf32>
      %c2_i32_82 = arith.constant 2 : i32
      %171 = vector.broadcast %c2_i32_82 : i32 to vector<8x128xi32>
      %172 = arith.cmpi eq, %159, %171 : vector<8x128xi32>
      %173 = vector.shape_cast %158 : vector<8x1xf32> to vector<8x1xf32>
      %174 = vector.broadcast %173 : vector<8x1xf32> to vector<8x128xf32>
      %175 = arith.select %172, %174, %170 : vector<8x128xi1>, vector<8x128xf32>
      %c0_83 = arith.constant 0 : index
      %c0_84 = arith.constant 0 : index
      %176 = vector.load %arg4[%c0_83, %c0_84] : memref<8x128xf32, #tpu.memory_space<vmem>>, vector<8x128xf32>
      tpu.vector_store %arg4[%c0_83, %c0_84], %175 {strides = array<i32>} : memref<8x128xf32, #tpu.memory_space<vmem>>, vector<8x128xf32>,
    } else {
    }
    return
  }
  func.func @transform_0(%arg0: i32, %arg1: i32) -> (i32, i32, i32) {
    %c0_i32 = arith.constant 0 : i32
    %c0_i32_0 = arith.constant 0 : i32
    return %c0_i32, %arg0, %arg1 : i32, i32, i32
  }
  func.func @transform_1(%arg0: i32, %arg1: i32) -> (i32, i32) {
    %c0_i32 = arith.constant 0 : i32
    return %arg0, %arg1 : i32, i32
  }
  func.func @transform_2(%arg0: i32, %arg1: i32) -> (i32, i32) {
    %c0_i32 = arith.constant 0 : i32
    %c0_i32_0 = arith.constant 0 : i32
    return %arg0, %c0_i32 : i32, i32
  }
}

</mosaic_0001>

<llo_original>
// kernel: _forward_sparse_core.2
$region0: #{_forward_sparse_core.2}
  #allocation0 [shape = 'u32[]', space=smem, size = 0x4, offset = 0x4, fixed_abs, tag = 'smem constant byte address 0x4 - core index']
  #allocation1 [shape = 'u32[144,128]{1,0:T(1,128)}', space=vmem, size = 0x12000, scoped, tag = 'internal scratch']
  %s0 = inlined_call_operand.vmem [shape: f32[8,8,384], index: 0, kind: input, shape index: {}]
  %s1 = inlined_call_operand.vmem [shape: f32[8,384], index: 1, kind: input, shape index: {}]
  %s2 = inlined_call_operand.vmem [shape: f32[8,384], index: 2, kind: output, shape index: {}]
  %s3 = sld [smem:[#allocation0]]
  $region18: #{_forward_sparse_core.2} parent=0
    _
  %s5 = ssub.s32 1, %s3
  %s6 = scalar_select 0, %s5, %s3
  // Predicated region
  $region2: #{_forward_sparse_core.2} parent=0 // pred_check
    _
  $region3: #{_forward_sparse_core.2} parent=0 // pred_check_branch
    %8 = sbr.rel (0) target = $region5
  $region4: #{_forward_sparse_core.2} parent=0 // pred_region
    _
  $region5: #{_forward_sparse_core.2} parent=0 // pred_fallthru
    _
  // Predicated region
  $region6: #{_forward_sparse_core.2} parent=0 // pred_check
    _
  $region7: #{_forward_sparse_core.2} parent=0 // pred_check_branch
    %10 = sbr.rel (0) target = $region9
  $region8: #{_forward_sparse_core.2} parent=0 // pred_region
    _
  $region9: #{_forward_sparse_core.2} parent=0 // pred_fallthru
    _
  %v11 = vld [vmem:[%s0] sm:$0xff]
  %v12 = vld [vmem:[%s0 + $0x8] sm:$0xff]
  %v13 = vld [vmem:[%s0 + $0x10] sm:$0xff]
  %s14 = scalar_lea.vmem %s0, 24
  %v15 = vld [vmem:[%s14] sm:$0xff]
  %v16 = vld [vmem:[%s14 + $0x8] sm:$0xff]
  %v17 = vld [vmem:[%s14 + $0x10] sm:$0xff]
  %v18 = vmin.f32 %v15, %v11
  %v19 = vmin.f32 %v16, %v12
  %v20 = vmin.f32 %v17, %v13
  %v21 = vmax.f32 %v18, -1e+30
  %v22 = vmax.f32 %v19, -1e+30
  %v23 = vmax.f32 %v20, -1e+30
  %v24 = vmax.f32 %v11, %v15
  %v25 = vmax.f32 %v12, %v16
  %v26 = vmax.f32 %v13, %v17
  %s27 = scalar_lea.vmem %s0, 48
  %v28 = vld [vmem:[%s27] sm:$0xff]
  %v29 = vld [vmem:[%s27 + $0x8] sm:$0xff]
  %v30 = vld [vmem:[%s27 + $0x10] sm:$0xff]
  %v31 = vmin.f32 %v28, %v24
  %v32 = vmin.f32 %v29, %v25
  %v33 = vmin.f32 %v30, %v26
  %v34 = vmax.f32 %v21, %v31
  %v35 = vmax.f32 %v22, %v32
  %v36 = vmax.f32 %v23, %v33
  %v37 = vmax.f32 %v24, %v28
  %v38 = vmax.f32 %v25, %v29
  %v39 = vmax.f32 %v26, %v30
  %s40 = scalar_lea.vmem %s0, 72
  %v41 = vld [vmem:[%s40] sm:$0xff]
  %v42 = vld [vmem:[%s40 + $0x8] sm:$0xff]
  %v43 = vld [vmem:[%s40 + $0x10] sm:$0xff]
  %v44 = vmin.f32 %v41, %v37
  %v45 = vmin.f32 %v42, %v38
  %v46 = vmin.f32 %v43, %v39
  %v47 = vmax.f32 %v34, %v44
  %v48 = vmax.f32 %v35, %v45
  %v49 = vmax.f32 %v36, %v46
  %v50 = vmax.f32 %v37, %v41
  %v51 = vmax.f32 %v38, %v42
  %v52 = vmax.f32 %v39, %v43
  %s53 = scalar_lea.vmem %s0, 96
  %v54 = vld [vmem:[%s53] sm:$0xff]
  %v55 = vld [vmem:[%s53 + $0x8] sm:$0xff]
  %v56 = vld [vmem:[%s53 + $0x10] sm:$0xff]
  %v57 = vmin.f32 %v54, %v50
  %v58 = vmin.f32 %v55, %v51
  %v59 = vmin.f32 %v56, %v52
  %v60 = vmax.f32 %v47, %v57
  %v61 = vmax.f32 %v48, %v58
  %v62 = vmax.f32 %v49, %v59
  %v63 = vmax.f32 %v50, %v54
  %v64 = vmax.f32 %v51, %v55
  %v65 = vmax.f32 %v52, %v56
  %s66 = scalar_lea.vmem %s0, 120
  %v67 = vld [vmem:[%s66] sm:$0xff]
  %v68 = vld [vmem:[%s66 + $0x8] sm:$0xff]
  %v69 = vld [vmem:[%s66 + $0x10] sm:$0xff]
  %v70 = vmin.f32 %v67, %v63
  %v71 = vmin.f32 %v68, %v64
  %v72 = vmin.f32 %v69, %v65
  %v73 = vmax.f32 %v60, %v70
  %v74 = vmax.f32 %v61, %v71
  %v75 = vmax.f32 %v62, %v72
  %v76 = vmax.f32 %v63, %v67
  %v77 = vmax.f32 %v64, %v68
  %v78 = vmax.f32 %v65, %v69
  %s79 = scalar_lea.vmem %s0, 144
  %v80 = vld [vmem:[%s79] sm:$0xff]
  %v81 = vld [vmem:[%s79 + $0x8] sm:$0xff]
  %v82 = vld [vmem:[%s79 + $0x10] sm:$0xff]
  %v83 = vmin.f32 %v80, %v76
  %v84 = vmin.f32 %v81, %v77
  %v85 = vmin.f32 %v82, %v78
  %v86 = vmax.f32 %v73, %v83
  %v87 = vmax.f32 %v74, %v84
  %v88 = vmax.f32 %v75, %v85
  %v89 = vmax.f32 %v76, %v80
  %v90 = vmax.f32 %v77, %v81
  %v91 = vmax.f32 %v78, %v82
  %s92 = scalar_lea.vmem %s0, 168
  %v93 = vld [vmem:[%s92] sm:$0xff]
  %v94 = vld [vmem:[%s92 + $0x8] sm:$0xff]
  %v95 = vld [vmem:[%s92 + $0x10] sm:$0xff]
  %v96 = vmin.f32 %v93, %v89
  %v97 = vmin.f32 %v94, %v90
  %v98 = vmin.f32 %v95, %v91
  %v99 = vmax.f32 %v86, %v96
  %v100 = vmax.f32 %v87, %v97
  %v101 = vmax.f32 %v88, %v98
  %v102 = vmax.f32 %v89, %v93
  %v103 = vmax.f32 %v90, %v94
  %v104 = vmax.f32 %v91, %v95
  %v105 = vsub.f32 %v99, %v102
  %v106 = vsub.f32 %v100, %v103
  %v107 = vsub.f32 %v101, %v104
  %v108 = vld [vmem:[%s1] sm:$0xff]
  %v109 = vld [vmem:[%s1 + $0x8] sm:$0xff]
  %v110 = vld [vmem:[%s1 + $0x10] sm:$0xff]
  %vm111 = vcmp.ne.f32.partialorder %v108, 0.0
  %vm112 = vcmp.ne.f32.partialorder %v109, 0.0
  %vm113 = vcmp.ne.f32.partialorder %v110, 0.0
  %v114 = vsel %vm111, -1000.0, %v105
  %v115 = vsel %vm112, -1000.0, %v106
  %v116 = vsel %vm113, -1000.0, %v107
  %117 = vst [vmem:[%s2] sm:$0xff] %v114
  %118 = vst [vmem:[%s2 + $0x8] sm:$0xff] %v115
  %119 = vst [vmem:[%s2 + $0x10] sm:$0xff] %v116
  // Predicated region
  $region10: #{_forward_sparse_core.2} parent=0 // pred_check
    _
  $region11: #{_forward_sparse_core.2} parent=0 // pred_check_branch
    %121 = sbr.rel (0) target = $region13
  $region12: #{_forward_sparse_core.2} parent=0 // pred_region
    _
  $region13: #{_forward_sparse_core.2} parent=0 // pred_fallthru
    _
  // Predicated region
  $region14: #{_forward_sparse_core.2} parent=0 // pred_check
    _
  $region15: #{_forward_sparse_core.2} parent=0 // pred_check_branch
    %123 = sbr.rel (0) target = $region17
  $region16: #{_forward_sparse_core.2} parent=0 // pred_region
    _
  $region17: #{_forward_sparse_core.2} parent=0 // pred_fallthru
    _

// kernel: squeeze.53
$region0: #{squeeze.53}
  %s0 = inlined_call_operand.vmem [shape: f32[8], index: 0, kind: input, shape index: {}]
  %s1 = inlined_call_operand.vmem [shape: f32[2,4], index: 1, kind: output, shape index: {}]
  $region1: #{squeeze.53} parent=0
    #allocation0 [shape = 'u8[4096]{0}', space=vmem, size = 0x1000, scoped, tag = 'scoped mem for output reshape']
    #allocation1 [shape = 'u8[4096]{0}', space=vmem, size = 0x1000, scoped, tag = 'scoped mem for input reshape']
    %s3 = sshllo.u32 0, 1
    %v4 = vld [vmem:[%s0] sm:%s3]
    %5 = vst [vmem:[#allocation1] sm:%s3] %v4
    %v6 = vld [vmem:[#allocation1] sm:$0x1]
    %vm7 = vcmask 31744
    %8 = vst.msk [vmem:[#allocation0] sm:$0x1] %vm7, %v6
    %v9 = vld [vmem:[#allocation1] sm:$0x1]
    %10 = vrot.lane.b32.xlu0 %v9, 124
    %v11 = vpop.permute.xlu0 %10
    %vm12 = vcmask 31744
    %s13 = scalar_lea.vmem [#allocation0], 1
    %14 = vst.msk [vmem:[%s13] sm:$0x1] %vm12, %v11
    %s16 = sshllo.u32 0, 2
    %v18 = vld [vmem:[#allocation0] sm:%s16]
    %s19 = sshllo.u32 0, 2
    %20 = vst [vmem:[%s1] sm:%s19] %v18

// kernel: _forward_sparse_core.3
$region0: #{_forward_sparse_core.3}
  #allocation0 [shape = 'u32[]', space=smem, size = 0x4, offset = 0x4, fixed_abs, tag = 'smem constant byte address 0x4 - core index']
  #allocation1 [shape = 'u32[144,128]{1,0:T(1,128)}', space=vmem, size = 0x12000, scoped, tag = 'internal scratch']
  #allocation2 [shape = 'f32[8,128]{1,0:T(8,128)}', space=vmem, size = 0x1000, scoped, tag = 'scratch operand']
  #allocation3 [shape = 'f32[8,128]{1,0:T(8,128)}', space=vmem, size = 0x1000, scoped, tag = 'scratch operand']
  #allocation4 [shape = 'f32[8,128]{1,0:T(8,128)}', space=vmem, size = 0x1000, scoped, tag = 'scratch operand']
  %s0 = inlined_call_operand.vmem [shape: f32[8,8,128], index: 0, kind: input, shape index: {}]
  %s1 = inlined_call_operand.vmem [shape: s32[8,128], index: 1, kind: input, shape index: {}]
  %s2 = inlined_call_operand.vmem [shape: f32[8,128], index: 2, kind: output, shape index: {}]
  %s3 = sld [smem:[#allocation0]]
  $region26: #{_forward_sparse_core.3} parent=0
    _
  %s5 = ssub.s32 1, %s3
  %s6 = scalar_select 0, %s5, %s3
  // Predicated region
  $region2: #{_forward_sparse_core.3} parent=0 // pred_check
    _
  $region3: #{_forward_sparse_core.3} parent=0 // pred_check_branch
    %8 = sbr.rel (0) target = $region5
  $region4: #{_forward_sparse_core.3} parent=0 // pred_region
    _
  $region5: #{_forward_sparse_core.3} parent=0 // pred_fallthru
    _
  // Predicated region
  $region6: #{_forward_sparse_core.3} parent=0 // pred_check
    _
  $region7: #{_forward_sparse_core.3} parent=0 // pred_check_branch
    %10 = sbr.rel (0) target = $region9
  $region8: #{_forward_sparse_core.3} parent=0 // pred_region
    _
  $region9: #{_forward_sparse_core.3} parent=0 // pred_fallthru
    _
  %p11 = scmp.eq.s32.totalorder 0, 0
  // Predicated region
  $region10: #{_forward_sparse_core.3} parent=0 // pred_check
    %p12 = pneg %p11
  $region11: #{_forward_sparse_core.3} parent=0 // pred_check_branch
    %14 = sbr.rel (%p12) target = $region13
  $region12: #{_forward_sparse_core.3} parent=0 // pred_region
    %15 = vst [vmem:[#allocation2] sm:$0xff] 0.0
    %16 = vst [vmem:[#allocation3] sm:$0xff] 0.0
    %17 = vst [vmem:[#allocation4] sm:$0xff] 0.0
  $region13: #{_forward_sparse_core.3} parent=0 // pred_fallthru
    _
  %v18 = vld [vmem:[%s1] sm:$0xff]
  %vm19 = vcmp.ne.s32.totalorder %v18, 4294967196
  %v20 = vsel %vm19, %v18, 0
  %v21 = vld [vmem:[%s0] sm:$0xff]
  %s22 = scalar_lea.vmem %s0, 8
  %v23 = vld [vmem:[%s22] sm:$0xff]
  %v24 = vmax.f32 %v21, %v23
  %s25 = scalar_lea.vmem %s0, 16
  %v26 = vld [vmem:[%s25] sm:$0xff]
  %v27 = vmax.f32 %v24, %v26
  %s28 = scalar_lea.vmem %s0, 24
  %v29 = vld [vmem:[%s28] sm:$0xff]
  %v30 = vmax.f32 %v27, %v29
  %s31 = scalar_lea.vmem %s0, 32
  %v32 = vld [vmem:[%s31] sm:$0xff]
  %v33 = vmax.f32 %v30, %v32
  %s34 = scalar_lea.vmem %s0, 40
  %v35 = vld [vmem:[%s34] sm:$0xff]
  %v36 = vmax.f32 %v33, %v35
  %s37 = scalar_lea.vmem %s0, 48
  %v38 = vld [vmem:[%s37] sm:$0xff]
  %v39 = vmax.f32 %v36, %v38
  %s40 = scalar_lea.vmem %s0, 56
  %v41 = vld [vmem:[%s40] sm:$0xff]
  %v42 = vmax.f32 %v39, %v41
  %v43 = vsub.f32 %v21, %v42
  %v44 = vmul.f32 %v43, 1.442695
  %v45 = vpow.pop %v44
  %v46 = vadd.f32 %v45, 0.0
  %vm47 = vcmp.eq.s32.totalorder %v20, 0
  %v48 = vsel %vm47, %v21, 0.0
  %v49 = vadd.f32 %v48, 0.0
  %v50 = vmul.f32 %v21, %v21
  %v51 = vadd.f32 %v50, 0.0
  %v52 = vsub.f32 %v23, %v42
  %v53 = vmul.f32 %v52, 1.442695
  %v54 = vpow.pop %v53
  %v55 = vadd.f32 %v46, %v54
  %vm56 = vcmp.eq.s32.totalorder %v20, 1
  %v57 = vsel %vm56, %v23, 0.0
  %v58 = vadd.f32 %v49, %v57
  %v59 = vmul.f32 %v23, %v23
  %v60 = vadd.f32 %v51, %v59
  %v61 = vsub.f32 %v26, %v42
  %v62 = vmul.f32 %v61, 1.442695
  %v63 = vpow.pop %v62
  %v64 = vadd.f32 %v55, %v63
  %vm65 = vcmp.eq.s32.totalorder %v20, 2
  %v66 = vsel %vm65, %v26, 0.0
  %v67 = vadd.f32 %v58, %v66
  %v68 = vmul.f32 %v26, %v26
  %v69 = vadd.f32 %v60, %v68
  %v70 = vsub.f32 %v29, %v42
  %v71 = vmul.f32 %v70, 1.442695
  %v72 = vpow.pop %v71
  %v73 = vadd.f32 %v64, %v72
  %vm74 = vcmp.eq.s32.totalorder %v20, 3
  %v75 = vsel %vm74, %v29, 0.0
  %v76 = vadd.f32 %v67, %v75
  %v77 = vmul.f32 %v29, %v29
  %v78 = vadd.f32 %v69, %v77
  %v79 = vsub.f32 %v32, %v42
  %v80 = vmul.f32 %v79, 1.442695
  %v81 = vpow.pop %v80
  %v82 = vadd.f32 %v73, %v81
  %vm83 = vcmp.eq.s32.totalorder %v20, 4
  %v84 = vsel %vm83, %v32, 0.0
  %v85 = vadd.f32 %v76, %v84
  %v86 = vmul.f32 %v32, %v32
  %v87 = vadd.f32 %v78, %v86
  %v88 = vsub.f32 %v35, %v42
  %v89 = vmul.f32 %v88, 1.442695
  %v90 = vpow.pop %v89
  %v91 = vadd.f32 %v82, %v90
  %vm92 = vcmp.eq.s32.totalorder %v20, 5
  %v93 = vsel %vm92, %v35, 0.0
  %v94 = vadd.f32 %v85, %v93
  %v95 = vmul.f32 %v35, %v35
  %v96 = vadd.f32 %v87, %v95
  %v97 = vsub.f32 %v38, %v42
  %v98 = vmul.f32 %v97, 1.442695
  %v99 = vpow.pop %v98
  %v100 = vadd.f32 %v91, %v99
  %vm101 = vcmp.eq.s32.totalorder %v20, 6
  %v102 = vsel %vm101, %v38, 0.0
  %v103 = vadd.f32 %v94, %v102
  %v104 = vmul.f32 %v38, %v38
  %v105 = vadd.f32 %v96, %v104
  %v106 = vsub.f32 %v41, %v42
  %v107 = vmul.f32 %v106, 1.442695
  %v108 = vpow.pop %v107
  %v109 = vadd.f32 %v100, %v108
  %vm110 = vcmp.eq.s32.totalorder %v20, 7
  %v111 = vsel %vm110, %v41, 0.0
  %v112 = vadd.f32 %v103, %v111
  %v113 = vmul.f32 %v41, %v41
  %v114 = vadd.f32 %v105, %v113
  %v115 = vlog2.pop %v109
  %v116 = vmul.f32 %v115, 0.6931472
  %v117 = vadd.f32 %v42, %v116
  %v118 = vld [vmem:[#allocation2] sm:$0xff]
  %v119 = vsub.f32 %v117, %v112
  %v120 = vsel %vm19, %v119, 0.0
  %v121 = vadd.f32 %v118, %v120
  %122 = vst [vmem:[#allocation2] sm:$0xff] %v121
  %v123 = vld [vmem:[#allocation3] sm:$0xff]
  %v124 = vsel %vm19, 1, 0
  %v125 = vcvt.s32.f32 %v124
  %v126 = vadd.f32 %v123, %v125
  %127 = vst [vmem:[#allocation3] sm:$0xff] %v126
  %v128 = vld [vmem:[#allocation4] sm:$0xff]
  %v129 = vrsqrt.pop %v114
  %v130 = vmul.f32 %v114, %v129
  %vm131 = vcmp.eq.f32.partialorder %v114, inf
  %v132 = vsel %vm131, %v114, %v130
  %vm133 = vcmp.eq.f32.partialorder %v114, 0.0
  %v134 = vand.u32 %v114, 2147483648
  %v135 = vsel %vm133, %v134, %v132
  %v136 = vadd.f32 %v128, %v135
  %137 = vst [vmem:[#allocation4] sm:$0xff] %v136
  // Predicated region
  $region14: #{_forward_sparse_core.3} parent=0 // pred_check
    %p138 = pneg %p11
  $region15: #{_forward_sparse_core.3} parent=0 // pred_check_branch
    %140 = sbr.rel (%p138) target = $region17
  $region16: #{_forward_sparse_core.3} parent=0 // pred_region
    %v141 = vld [vmem:[#allocation2] sm:$0xff]
    %142 = vadd.xlane.f32.xlu0 %v141
    %v143 = vpop.xlane.xlu0 %142
    %v144 = vld [vmem:[#allocation3] sm:$0xff]
    %145 = vadd.xlane.f32.xlu0 %v144
    %v146 = vpop.xlane.xlu0 %145
    %v147 = vld [vmem:[#allocation4] sm:$0xff]
    %148 = vadd.xlane.f32.xlu0 %v147
    %v149 = vpop.xlane.xlu0 %148
    %v150 = vlaneseq
    %v151 = vand.u32 %v150, 127
    %vm152 = vcmp.eq.s32.totalorder %v151, 0
    %v153 = vsel %vm152, %v143, 0.0
    %vm154 = vcmp.eq.s32.totalorder %v151, 1
    %v155 = vsel %vm154, %v146, %v153
    %vm156 = vcmp.eq.s32.totalorder %v151, 2
    %v157 = vsel %vm156, %v149, %v155
    %158 = vst [vmem:[%s2] sm:$0xff] %v157
  $region17: #{_forward_sparse_core.3} parent=0 // pred_fallthru
    _
  // Predicated region
  $region18: #{_forward_sparse_core.3} parent=0 // pred_check
    _
  $region19: #{_forward_sparse_core.3} parent=0 // pred_check_branch
    %160 = sbr.rel (0) target = $region21
  $region20: #{_forward_sparse_core.3} parent=0 // pred_region
    _
  $region21: #{_forward_sparse_core.3} parent=0 // pred_fallthru
    _
  // Predicated region
  $region22: #{_forward_sparse_core.3} parent=0 // pred_check
    _
  $region23: #{_forward_sparse_core.3} parent=0 // pred_check_branch
    %162 = sbr.rel (0) target = $region25
  $region24: #{_forward_sparse_core.3} parent=0 // pred_region
    _
  $region25: #{_forward_sparse_core.3} parent=0 // pred_fallthru
    _

</llo_original>
